<compile_context>
chip_gen: v6e
topology: v6e:2x2x1
jax: 0.10.0
libtpu: 0.0.40
codegen_flags: <defaults>
</compile_context>

<pallas_src>
import functools

import jax
import jax.numpy as jnp
from jax.experimental import pallas as pl
from jax.experimental.pallas import tpu as pltpu

LANES = 128
MAX_ROW_TILE = 8192                    # never exceed (review: v7x headroom)
DOUBLE_BUF_INPUT_BUDGET = 20 << 20     # bytes for 4 inputs x 2 pipeline buffers
VMEM_LIMIT_BYTES = 32 << 20            # explicit scoped-VMEM budget, all gens


def _round_up(x, m):
    return (x + m - 1) // m * m


def _cdiv(a, b):
    return -(-a // b)


def _sublane_multiple(dtype):
    # second-to-last block dim must be a multiple of the per-dtype sublane tile
    itemsize = jnp.dtype(dtype).itemsize
    return {4: 8, 2: 16, 1: 32}.get(itemsize, 8)


def _num_tensorcores():
    """1 on single-TC v5e/v6e, 2 on v7x (two TensorCores per chip)."""
    try:
        kind = jax.devices()[0].device_kind.lower()
    except Exception:
        return 1
    if "v7" in kind or "7x" in kind:
        return 2
    return 1


def _kdist_kernel(s_ref, t_ref, g_ref, w_ref, o_ref, acc_ref, *,
                  n_rows, row_tile, nblocks):
    c = pl.program_id(0)   # core ("parallel") axis
    t = pl.program_id(1)   # reduction ("arbitrary") axis

    @pl.when(t == 0)
    def _():
        acc_ref[...] = jnp.zeros_like(acc_ref)

    s = s_ref[...].astype(jnp.float32)
    te = t_ref[...].astype(jnp.float32)
    g = g_ref[...].astype(jnp.float32)
    w = w_ref[...].astype(jnp.float32)

    ds = s - g
    dt = te - g
    contrib = w * (ds * ds + dt * dt)      # fused: both weighted-SE terms

    # Only the last in-range block (ragged tail) and clamped-duplicate blocks
    # (index_map clamps OOB grid steps to nblocks-1) can contain rows that
    # must not contribute -> gate the mask work on those blocks only.
    linear_blk = c * pl.num_programs(1) + t
    needs_mask = linear_blk >= nblocks - 1

    @pl.when(needs_mask)
    def _():
        row_ids = linear_blk * row_tile + jax.lax.broadcasted_iota(
            jnp.int32, (row_tile, LANES), 0)
        # jnp.where (select), NOT multiply-by-mask: garbage Inf/NaN in the
        # out-of-range rows must never reach the accumulator.
        masked = jnp.where(row_ids < n_rows, contrib, 0.0)
        acc_ref[...] += jnp.sum(masked.reshape(-1, 8, LANES), axis=0)

    @pl.when(jnp.logical_not(needs_mask))
    def _():
        acc_ref[...] += jnp.sum(contrib.reshape(-1, 8, LANES), axis=0)

    @pl.when(t == pl.num_programs(1) - 1)
    def _():
        # Per-lane partial sums for this core; final cross-lane reduce and the
        # divide by N happen in the (tiny) wrapper epilogue.
        o_ref[...] = jnp.sum(acc_ref[...], axis=0,
                             keepdims=True).reshape(1, 1, LANES)


def _to_slab(x):
    """Flatten to (rows, 128) in the native dtype; pad only a <128-elem tail."""
    flat = x.reshape(-1)
    n = flat.shape[0]
    rows = _cdiv(n, LANES)
    pad = rows * LANES - n
    if pad:
        # Zero pad => padded entries contribute exactly zero (weight pad == 0).
        flat = jnp.pad(flat, (0, pad))
    return flat.reshape(rows, LANES), rows


def kdist_loss(student_output, teacher_output, target, weight):
    assert (student_output.shape == teacher_output.shape
            == target.shape == weight.shape), \
        "kernel implements the equal-shape case (no broadcasting)"
    n_elems = int(student_output.size)
    if n_elems == 0:
        # torch.mean over an empty tensor is NaN; also avoids nblocks-1 == -1.
        return jnp.float32(jnp.nan)

    s2, n_rows = _to_slab(student_output)
    t2, _ = _to_slab(teacher_output)
    g2, _ = _to_slab(target)
    w2, _ = _to_slab(weight)

    sub = max(_sublane_multiple(a.dtype) for a in (s2, t2, g2, w2))

    # Generation/dtype-aware tile: as many rows as fit a ~20 MiB
    # double-buffered-input budget, capped at MAX_ROW_TILE and at the input.
    bytes_per_row_2buf = sum(jnp.dtype(a.dtype).itemsize
                             for a in (s2, t2, g2, w2)) * LANES * 2
    budget_rows = max(sub,
                      (DOUBLE_BUF_INPUT_BUDGET // bytes_per_row_2buf) // sub * sub)
    row_tile = max(sub, min(MAX_ROW_TILE, budget_rows, _round_up(n_rows, sub)))

    num_cores = _num_tensorcores()
    nblocks = _cdiv(n_rows, row_tile)
    blocks_per_core = _cdiv(nblocks, num_cores)

    def in_map(c, t):
        # Clamp so the DMA always stays in-bounds; the in-kernel row mask
        # zeroes out clamped-duplicate / ragged-tail rows.
        return (jnp.minimum(c * blocks_per_core + t, nblocks - 1), 0)

    in_spec = pl.BlockSpec((row_tile, LANES), in_map)

    bytes_in = sum(int(a.size) * jnp.dtype(a.dtype).itemsize
                   for a in (student_output, teacher_output, target, weight))
    cost = pl.CostEstimate(flops=7 * n_elems,
                           transcendentals=0,
                           bytes_accessed=bytes_in + num_cores * LANES * 4)

    out = pl.pallas_call(
        functools.partial(_kdist_kernel, n_rows=n_rows, row_tile=row_tile,
                          nblocks=nblocks),
        out_shape=jax.ShapeDtypeStruct((num_cores, 1, LANES), jnp.float32),
        grid_spec=pltpu.PrefetchScalarGridSpec(
            num_scalar_prefetch=0,
            grid=(num_cores, blocks_per_core),
            in_specs=[in_spec, in_spec, in_spec, in_spec],
            out_specs=pl.BlockSpec((1, 1, LANES), lambda c, t: (c, 0, 0)),
            scratch_shapes=[pltpu.VMEM((8, LANES), jnp.float32)],
        ),
        compiler_params=pltpu.CompilerParams(
            dimension_semantics=("parallel", "arbitrary"),
            vmem_limit_bytes=VMEM_LIMIT_BYTES,
        ),
        cost_estimate=cost,
    )(s2, t2, g2, w2)

    # mean1 + mean2 == (sum1 + sum2) / N  (same element count in both terms)
    return jnp.sum(out) / n_elems


def kdist_loss_ref(student_output, teacher_output, target, weight):
    return (jnp.mean(weight * (student_output - target) ** 2)
            + jnp.mean(weight * (teacher_output - target) ** 2))


if __name__ == "__main__":
    key = jax.random.PRNGKey(0)
    k1, k2, k3, k4 = jax.random.split(key, 4)

    shape = (2, 4, 16, 16)  # NCHW
    student = jax.random.normal(k1, shape, dtype=jnp.float32)
    teacher = jax.random.normal(k2, shape, dtype=jnp.float32)
    target = jax.random.normal(k3, shape, dtype=jnp.float32)
    weight = jax.random.uniform(k4, shape, dtype=jnp.float32)

    loss = kdist_loss(student, teacher, target, weight)
    jax.block_until_ready(loss)

    ref = kdist_loss_ref(student, teacher, target, weight)
    assert jnp.allclose(loss, ref, rtol=1e-5, atol=1e-6), (loss, ref)

    print("KERNEL_OK")
</pallas_src>

<mosaic_0001>
module attributes {stable_mosaic.version = 11 : i64} {
  func.func @_kdist_kernel(%arg0: i32, %arg1: i32, %arg2: memref<16x128xf32, #tpu.memory_space<vmem>>, %arg3: memref<16x128xf32, #tpu.memory_space<vmem>>, %arg4: memref<16x128xf32, #tpu.memory_space<vmem>>, %arg5: memref<16x128xf32, #tpu.memory_space<vmem>>, %arg6: memref<1x1x128xf32, #tpu.memory_space<vmem>>, %arg7: memref<8x128xf32, #tpu.memory_space<vmem>>) attributes {dimension_semantics = [#tpu.dimension_semantics<parallel>, #tpu.dimension_semantics<arbitrary>], iteration_bounds = array<i64: 1, 1>, scalar_prefetch = 0 : i64, scratch_operands = 1 : i64, tpu.core_type = #tpu.core_type<tc>, window_params = [{transform_indices = @transform_0, window_bounds = array<i64: 16, 128>}, {transform_indices = @transform_1, window_bounds = array<i64: 16, 128>}, {transform_indices = @transform_2, window_bounds = array<i64: 16, 128>}, {transform_indices = @transform_3, window_bounds = array<i64: 16, 128>}, {transform_indices = @transform_4, window_bounds = array<i64: 1, 1, 128>}]} {
    %c0_i32 = arith.constant 0 : i32
    %0 = arith.cmpi eq, %arg1, %c0_i32 : i32
    %1 = arith.extui %0 : i1 to i32
    %c0_i32_0 = arith.constant 0 : i32
    %2 = arith.cmpi ne, %1, %c0_i32_0 : i32
    scf.if %2 {
      %cst = arith.constant 0.000000e+00 : f32
      %24 = vector.broadcast %cst : f32 to vector<8x128xf32>
      %c0_13 = arith.constant 0 : index
      %c0_14 = arith.constant 0 : index
      %25 = vector.load %arg7[%c0_13, %c0_14] : memref<8x128xf32, #tpu.memory_space<vmem>>, vector<8x128xf32>
      tpu.vector_store %arg7[%c0_13, %c0_14], %24 {strides = array<i32>} : memref<8x128xf32, #tpu.memory_space<vmem>>, vector<8x128xf32>,
    } else {
    }
    %c0 = arith.constant 0 : index
    %c0_1 = arith.constant 0 : index
    %3 = vector.load %arg2[%c0, %c0_1] : memref<16x128xf32, #tpu.memory_space<vmem>>, vector<16x128xf32>
    %c0_2 = arith.constant 0 : index
    %c0_3 = arith.constant 0 : index
    %4 = vector.load %arg3[%c0_2, %c0_3] : memref<16x128xf32, #tpu.memory_space<vmem>>, vector<16x128xf32>
    %c0_4 = arith.constant 0 : index
    %c0_5 = arith.constant 0 : index
    %5 = vector.load %arg4[%c0_4, %c0_5] : memref<16x128xf32, #tpu.memory_space<vmem>>, vector<16x128xf32>
    %c0_6 = arith.constant 0 : index
    %c0_7 = arith.constant 0 : index
    %6 = vector.load %arg5[%c0_6, %c0_7] : memref<16x128xf32, #tpu.memory_space<vmem>>, vector<16x128xf32>
    %7 = arith.subf %3, %5 : vector<16x128xf32>
    %8 = arith.subf %4, %5 : vector<16x128xf32>
    %9 = arith.mulf %7, %7 : vector<16x128xf32>
    %10 = arith.mulf %8, %8 : vector<16x128xf32>
    %11 = arith.addf %9, %10 : vector<16x128xf32>
    %12 = arith.mulf %6, %11 : vector<16x128xf32>
    %c1_i32 = arith.constant 1 : i32
    %13 = arith.muli %arg0, %c1_i32 : i32
    %14 = arith.addi %13, %arg1 : i32
    %c0_i32_8 = arith.constant 0 : i32
    %15 = arith.cmpi sge, %14, %c0_i32_8 : i32
    %16 = arith.extui %15 : i1 to i32
    %c0_i32_9 = arith.constant 0 : i32
    %17 = arith.cmpi ne, %16, %c0_i32_9 : i32
    scf.if %17 {
      %c16_i32 = arith.constant 16 : i32
      %24 = arith.muli %14, %c16_i32 : i32
      %25 = tpu.iota {dimensions = array<i32: 0>} : vector<16x128xi32>
      %26 = vector.broadcast %24 : i32 to vector<16x128xi32>
      %27 = arith.addi %26, %25 : vector<16x128xi32>
      %c16_i32_13 = arith.constant 16 : i32
      %28 = vector.broadcast %c16_i32_13 : i32 to vector<16x128xi32>
      %29 = arith.cmpi slt, %27, %28 : vector<16x128xi32>
      %cst = arith.constant 0.000000e+00 : f32
      %30 = vector.broadcast %cst : f32 to vector<16x128xf32>
      %31 = arith.select %29, %12, %30 : vector<16x128xi1>, vector<16x128xf32>
      %c0_14 = arith.constant 0 : index
      %c0_15 = arith.constant 0 : index
      %32 = vector.load %arg7[%c0_14, %c0_15] : memref<8x128xf32, #tpu.memory_space<vmem>>, vector<8x128xf32>
      %33 = vector.shape_cast %31 : vector<16x128xf32> to vector<2x8x128xf32>
      %cst_16 = arith.constant dense<0.000000e+00> : vector<8x128xf32>
      %34 = vector.multi_reduction <add>, %33, %cst_16 [0] : vector<2x8x128xf32> to vector<8x128xf32>
      %35 = arith.addf %32, %34 : vector<8x128xf32>
      %c0_17 = arith.constant 0 : index
      %c0_18 = arith.constant 0 : index
      %36 = vector.load %arg7[%c0_17, %c0_18] : memref<8x128xf32, #tpu.memory_space<vmem>>, vector<8x128xf32>
      tpu.vector_store %arg7[%c0_17, %c0_18], %35 {strides = array<i32>} : memref<8x128xf32, #tpu.memory_space<vmem>>, vector<8x128xf32>,
    } else {
    }
    %true = arith.constant true
    %18 = arith.xori %15, %true : i1
    %19 = arith.extui %18 : i1 to i32
    %c0_i32_10 = arith.constant 0 : i32
    %20 = arith.cmpi ne, %19, %c0_i32_10 : i32
    scf.if %20 {
      %c0_13 = arith.constant 0 : index
      %c0_14 = arith.constant 0 : index
      %24 = vector.load %arg7[%c0_13, %c0_14] : memref<8x128xf32, #tpu.memory_space<vmem>>, vector<8x128xf32>
      %25 = vector.shape_cast %12 : vector<16x128xf32> to vector<2x8x128xf32>
      %cst = arith.constant dense<0.000000e+00> : vector<8x128xf32>
      %26 = vector.multi_reduction <add>, %25, %cst [0] : vector<2x8x128xf32> to vector<8x128xf32>
      %27 = arith.addf %24, %26 : vector<8x128xf32>
      %c0_15 = arith.constant 0 : index
      %c0_16 = arith.constant 0 : index
      %28 = vector.load %arg7[%c0_15, %c0_16] : memref<8x128xf32, #tpu.memory_space<vmem>>, vector<8x128xf32>
      tpu.vector_store %arg7[%c0_15, %c0_16], %27 {strides = array<i32>} : memref<8x128xf32, #tpu.memory_space<vmem>>, vector<8x128xf32>,
    } else {
    }
    %c0_i32_11 = arith.constant 0 : i32
    %21 = arith.cmpi eq, %arg1, %c0_i32_11 : i32
    %22 = arith.extui %21 : i1 to i32
    %c0_i32_12 = arith.constant 0 : i32
    %23 = arith.cmpi ne, %22, %c0_i32_12 : i32
    scf.if %23 {
      %c0_13 = arith.constant 0 : index
      %c0_14 = arith.constant 0 : index
      %24 = vector.load %arg7[%c0_13, %c0_14] : memref<8x128xf32, #tpu.memory_space<vmem>>, vector<8x128xf32>
      %cst = arith.constant dense<0.000000e+00> : vector<128xf32>
      %25 = vector.multi_reduction <add>, %24, %cst [0] : vector<8x128xf32> to vector<128xf32>
      %26 = vector.shape_cast %25 : vector<128xf32> to vector<1x128xf32>
      %27 = vector.shape_cast %26 : vector<1x128xf32> to vector<1x1x128xf32>
      %c0_15 = arith.constant 0 : index
      %c0_16 = arith.constant 0 : index
      %c0_17 = arith.constant 0 : index
      %28 = vector.load %arg6[%c0_15, %c0_16, %c0_17] : memref<1x1x128xf32, #tpu.memory_space<vmem>>, vector<1x1x128xf32>
      tpu.vector_store %arg6[%c0_15, %c0_16, %c0_17], %27 {strides = array<i32>} : memref<1x1x128xf32, #tpu.memory_space<vmem>>, vector<1x1x128xf32>,
    } else {
    }
    return
  }
  func.func @transform_0(%arg0: i32, %arg1: i32) -> (i32, i32) {
    %c1_i32 = arith.constant 1 : i32
    %0 = arith.muli %arg0, %c1_i32 : i32
    %1 = arith.addi %0, %arg1 : i32
    %c0_i32 = arith.constant 0 : i32
    %2 = arith.minsi %1, %c0_i32 : i32
    %c0_i32_0 = arith.constant 0 : i32
    %c0_i32_1 = arith.constant 0 : i32
    return %2, %c0_i32_0 : i32, i32
  }
  func.func @transform_1(%arg0: i32, %arg1: i32) -> (i32, i32) {
    %c1_i32 = arith.constant 1 : i32
    %0 = arith.muli %arg0, %c1_i32 : i32
    %1 = arith.addi %0, %arg1 : i32
    %c0_i32 = arith.constant 0 : i32
    %2 = arith.minsi %1, %c0_i32 : i32
    %c0_i32_0 = arith.constant 0 : i32
    %c0_i32_1 = arith.constant 0 : i32
    return %2, %c0_i32_0 : i32, i32
  }
  func.func @transform_2(%arg0: i32, %arg1: i32) -> (i32, i32) {
    %c1_i32 = arith.constant 1 : i32
    %0 = arith.muli %arg0, %c1_i32 : i32
    %1 = arith.addi %0, %arg1 : i32
    %c0_i32 = arith.constant 0 : i32
    %2 = arith.minsi %1, %c0_i32 : i32
    %c0_i32_0 = arith.constant 0 : i32
    %c0_i32_1 = arith.constant 0 : i32
    return %2, %c0_i32_0 : i32, i32
  }
  func.func @transform_3(%arg0: i32, %arg1: i32) -> (i32, i32) {
    %c1_i32 = arith.constant 1 : i32
    %0 = arith.muli %arg0, %c1_i32 : i32
    %1 = arith.addi %0, %arg1 : i32
    %c0_i32 = arith.constant 0 : i32
    %2 = arith.minsi %1, %c0_i32 : i32
    %c0_i32_0 = arith.constant 0 : i32
    %c0_i32_1 = arith.constant 0 : i32
    return %2, %c0_i32_0 : i32, i32
  }
  func.func @transform_4(%arg0: i32, %arg1: i32) -> (i32, i32, i32) {
    %c0_i32 = arith.constant 0 : i32
    %c0_i32_0 = arith.constant 0 : i32
    %c0_i32_1 = arith.constant 0 : i32
    return %arg0, %c0_i32, %c0_i32_0 : i32, i32, i32
  }
}

</mosaic_0001>

<llo_original>
// kernel: tpu_custom_call.1
$region0: #{tpu_custom_call.1}
  #allocation0 [shape = 'u32[]', space=smem, size = 0x4, offset = 0x4, fixed_abs, tag = 'smem constant byte address 0x4 - core index']
  #allocation1 [shape = 'u32[144,128]{1,0:T(1,128)}', space=vmem, size = 0x12000, scoped, tag = 'internal scratch']
  #allocation2 [shape = 'f32[8,128]{1,0:T(8,128)}', space=vmem, size = 0x1000, scoped, tag = 'scratch operand']
  %s0 = inlined_call_operand.hbm [shape: f32[16,128], index: 0, kind: input, shape index: {}]
  %s1 = inlined_call_operand.hbm [shape: f32[16,128], index: 1, kind: input, shape index: {}]
  %s2 = inlined_call_operand.hbm [shape: f32[16,128], index: 2, kind: input, shape index: {}]
  %s3 = inlined_call_operand.hbm [shape: f32[16,128], index: 3, kind: input, shape index: {}]
  %s4 = inlined_call_operand.hbm [shape: f32[1,1,128], index: 4, kind: output, shape index: {}]
  %s5 = sld [smem:[#allocation0]]
  $region58: #{tpu_custom_call.1} parent=0
    _
  %s7 = ssub.s32 1, %s5
  %s8 = scalar_select 0, %s7, %s5
  $region1: #{tpu_custom_call.1} parent=0
    #allocation3 [shape = 'u8[8192]{0}', space=vmem, size = 0x2000, scoped, tag = 'input window, operand 0, single buffered']
    #allocation4 [shape = 's32[1]{0}', space=sflag, size = 0x4, scoped, tag = 'scoped memory for tpu_custom_call.1']
    #allocation5 [shape = 's32[1]{0}', space=sflag, size = 0x4, scoped, tag = 'scoped memory for tpu_custom_call.1']
    #allocation6 [shape = 'u8[8192]{0}', space=vmem, size = 0x2000, scoped, tag = 'input window, operand 1, single buffered']
    #allocation7 [shape = 's32[1]{0}', space=sflag, size = 0x4, scoped, tag = 'scoped memory for tpu_custom_call.1']
    #allocation8 [shape = 'u8[8192]{0}', space=vmem, size = 0x2000, scoped, tag = 'input window, operand 2, single buffered']
    #allocation9 [shape = 'u8[8192]{0}', space=vmem, size = 0x2000, scoped, tag = 'input window, operand 3, single buffered']
    #allocation10 [shape = 's32[1]{0}', space=sflag, size = 0x4, scoped, tag = 'scoped memory for tpu_custom_call.1']
    #allocation11 [shape = 'u8[512]{0}', space=vmem, size = 0x400, scoped, tag = 'output window, operand 0, single buffered']
    %9 = vsyncpa [#allocation4], 0
    %10 = vsyncpa [#allocation7], 0
    %11 = vsyncpa [#allocation10], 0
    %12 = vsyncpa [#allocation5], 0
    // Predicated region
    $region2: #{tpu_custom_call.1} parent=1 // pred_check
      _
    $region3: #{tpu_custom_call.1} parent=1 // pred_check_branch
      %14 = sbr.rel (0) target = $region5
    $region4: #{tpu_custom_call.1} parent=1 // pred_region
      %s15 = sadd.s32 0, 0
      %p16 = scmp.lt.s32.totalorder %s15, 0
      %s17 = scalar_select %p16, %s15, 0
      %s18 = smul.u32 2, %s17
      %s20 = ssub.s32 256, 256
      %21 = vsyncadd [#allocation4], %s20
      %s22 = smul.addr %s18, 128
      %s23 = scalar_lea.hbm %s0, %s22
      %s24 = sshll.u32 [#allocation3], 4
      %s25 = int_to_ptr.vmem [resolvable:$true] %s24
      %30 = dma.hbm_to_vmem [thread:$0]  %s23, 256, %s25, [#allocation4], 128, 128, 8
    $region5: #{tpu_custom_call.1} parent=1 // pred_fallthru
      _
    // Predicated region
    $region6: #{tpu_custom_call.1} parent=1 // pred_check
      _
    $region7: #{tpu_custom_call.1} parent=1 // pred_check_branch
      %32 = sbr.rel (0) target = $region9
    $region8: #{tpu_custom_call.1} parent=1 // pred_region
      %s33 = sadd.s32 0, 0
      %p34 = scmp.lt.s32.totalorder %s33, 0
      %s35 = scalar_select %p34, %s33, 0
      %s36 = smul.u32 2, %s35
      %s38 = ssub.s32 256, 256
      %39 = vsyncadd [#allocation7], %s38
      %s40 = smul.addr %s36, 128
      %s41 = scalar_lea.hbm %s1, %s40
      %s42 = sshll.u32 [#allocation6], 4
      %s43 = int_to_ptr.vmem [resolvable:$true] %s42
      %48 = dma.hbm_to_vmem [thread:$0]  %s41, 256, %s43, [#allocation7], 128, 128, 8
    $region9: #{tpu_custom_call.1} parent=1 // pred_fallthru
      _
    // Predicated region
    $region10: #{tpu_custom_call.1} parent=1 // pred_check
      _
    $region11: #{tpu_custom_call.1} parent=1 // pred_check_branch
      %50 = sbr.rel (0) target = $region13
    $region12: #{tpu_custom_call.1} parent=1 // pred_region
      %s51 = sadd.s32 0, 0
      %p52 = scmp.lt.s32.totalorder %s51, 0
      %s53 = scalar_select %p52, %s51, 0
      %s54 = smul.u32 2, %s53
      %s56 = ssub.s32 256, 256
      %57 = vsyncadd [#allocation7], %s56
      %s58 = smul.addr %s54, 128
      %s59 = scalar_lea.hbm %s2, %s58
      %s60 = sshll.u32 [#allocation8], 4
      %s61 = int_to_ptr.vmem [resolvable:$true] %s60
      %66 = dma.hbm_to_vmem [thread:$0]  %s59, 256, %s61, [#allocation7], 128, 128, 8
    $region13: #{tpu_custom_call.1} parent=1 // pred_fallthru
      _
    // Predicated region
    $region14: #{tpu_custom_call.1} parent=1 // pred_check
      _
    $region15: #{tpu_custom_call.1} parent=1 // pred_check_branch
      %68 = sbr.rel (0) target = $region17
    $region16: #{tpu_custom_call.1} parent=1 // pred_region
      %s69 = sadd.s32 0, 0
      %p70 = scmp.lt.s32.totalorder %s69, 0
      %s71 = scalar_select %p70, %s69, 0
      %s72 = smul.u32 2, %s71
      %s74 = ssub.s32 256, 256
      %75 = vsyncadd [#allocation10], %s74
      %s76 = smul.addr %s72, 128
      %s77 = scalar_lea.hbm %s3, %s76
      %s78 = sshll.u32 [#allocation9], 4
      %s79 = int_to_ptr.vmem [resolvable:$true] %s78
      %84 = dma.hbm_to_vmem [thread:$0]  %s77, 256, %s79, [#allocation10], 128, 128, 8
    $region17: #{tpu_custom_call.1} parent=1 // pred_fallthru
      _
    // Predicated region
    $region18: #{tpu_custom_call.1} parent=1 // pred_check
      _
    $region19: #{tpu_custom_call.1} parent=1 // pred_check_branch
      %86 = sbr.rel (0) target = $region21
    $region20: #{tpu_custom_call.1} parent=1 // pred_region
      %87 = dma.done [#allocation4], 256
    $region21: #{tpu_custom_call.1} parent=1 // pred_fallthru
      _
    // Predicated region
    $region22: #{tpu_custom_call.1} parent=1 // pred_check
      _
    $region23: #{tpu_custom_call.1} parent=1 // pred_check_branch
      %89 = sbr.rel (0) target = $region25
    $region24: #{tpu_custom_call.1} parent=1 // pred_region
      %90 = dma.done [#allocation7], 256
    $region25: #{tpu_custom_call.1} parent=1 // pred_fallthru
      _
    // Predicated region
    $region26: #{tpu_custom_call.1} parent=1 // pred_check
      _
    $region27: #{tpu_custom_call.1} parent=1 // pred_check_branch
      %92 = sbr.rel (0) target = $region29
    $region28: #{tpu_custom_call.1} parent=1 // pred_region
      %93 = dma.done [#allocation7], 256
    $region29: #{tpu_custom_call.1} parent=1 // pred_fallthru
      _
    // Predicated region
    $region30: #{tpu_custom_call.1} parent=1 // pred_check
      _
    $region31: #{tpu_custom_call.1} parent=1 // pred_check_branch
      %95 = sbr.rel (0) target = $region33
    $region32: #{tpu_custom_call.1} parent=1 // pred_region
      %96 = dma.done [#allocation10], 256
    $region33: #{tpu_custom_call.1} parent=1 // pred_fallthru
      _
    %s97 = sadd.s32 0, 0
    %p98 = scmp.lt.s32.totalorder %s97, 0
    %s99 = scalar_select %p98, %s97, 0
    %s100 = smul.u32 2, %s99
    %s101 = sadd.s32 0, 0
    %p102 = scmp.lt.s32.totalorder %s101, 0
    %s103 = scalar_select %p102, %s101, 0
    %s104 = smul.u32 2, %s103
    %s105 = sadd.s32 0, 0
    %p106 = scmp.lt.s32.totalorder %s105, 0
    %s107 = scalar_select %p106, %s105, 0
    %s108 = smul.u32 2, %s107
    %s109 = sadd.s32 0, 0
    %p110 = scmp.lt.s32.totalorder %s109, 0
    %s111 = scalar_select %p110, %s109, 0
    %s112 = smul.u32 2, %s111
    %p113 = scmp.eq.s32.totalorder 0, 0
    // Predicated region
    $region34: #{tpu_custom_call.1} parent=1 // pred_check
      %p114 = pneg %p113
    $region35: #{tpu_custom_call.1} parent=1 // pred_check_branch
      %116 = sbr.rel (%p114) target = $region37
    $region36: #{tpu_custom_call.1} parent=1 // pred_region
      %117 = vst [vmem:[#allocation2] sm:$0xff] 0.0
    $region37: #{tpu_custom_call.1} parent=1 // pred_fallthru
      _
    %v118 = vld [vmem:[#allocation3] sm:$0xff]
    %v119 = vld [vmem:[#allocation3 + $0x8] sm:$0xff]
    %v120 = vld [vmem:[#allocation6] sm:$0xff]
    %v121 = vld [vmem:[#allocation6 + $0x8] sm:$0xff]
    %v122 = vld [vmem:[#allocation8] sm:$0xff]
    %v123 = vld [vmem:[#allocation8 + $0x8] sm:$0xff]
    %v124 = vld [vmem:[#allocation9] sm:$0xff]
    %v125 = vld [vmem:[#allocation9 + $0x8] sm:$0xff]
    %v126 = vsub.f32 %v118, %v122
    %v127 = vsub.f32 %v119, %v123
    %v128 = vsub.f32 %v120, %v122
    %v129 = vsub.f32 %v121, %v123
    %v130 = vmul.f32 %v126, %v126
    %v131 = vmul.f32 %v127, %v127
    %v132 = vmul.f32 %v128, %v128
    %v133 = vmul.f32 %v129, %v129
    %v134 = vadd.f32 %v130, %v132
    %v135 = vadd.f32 %v131, %v133
    %v136 = vmul.f32 %v124, %v134
    %v137 = vmul.f32 %v125, %v135
    %s138 = sadd.s32 0, 0
    %p139 = scmp.ge.s32.totalorder %s138, 0
    // Predicated region
    $region38: #{tpu_custom_call.1} parent=1 // pred_check
      %p140 = pneg %p139
    $region39: #{tpu_custom_call.1} parent=1 // pred_check_branch
      %142 = sbr.rel (%p140) target = $region41
    $region40: #{tpu_custom_call.1} parent=1 // pred_region
      %s143 = smul.u32 %s138, 16
      %v144 = vlaneseq
      %v145 = vshrl.u32 %v144, 7
      %v146 = vadd.s32 %v145, 8
      %v147 = vstv %s143
      %v148 = vadd.s32 %v147, %v145
      %v149 = vadd.s32 %v147, %v146
      %vm150 = vcmp.lt.s32.totalorder %v148, 16
      %vm151 = vcmp.lt.s32.totalorder %v149, 16
      %v152 = vsel %vm150, %v136, 0.0
      %v153 = vsel %vm151, %v137, 0.0
      %v154 = vld [vmem:[#allocation2] sm:$0xff]
      %v155 = vadd.f32 %v152, %v153
      %v156 = vadd.f32 %v154, %v155
      %157 = vst [vmem:[#allocation2] sm:$0xff] %v156
    $region41: #{tpu_custom_call.1} parent=1 // pred_fallthru
      _
    %p158 = scmp.lt.s32.totalorder %s138, 0
    // Predicated region
    $region42: #{tpu_custom_call.1} parent=1 // pred_check
      %p159 = pneg %p158
    $region43: #{tpu_custom_call.1} parent=1 // pred_check_branch
      %161 = sbr.rel (%p159) target = $region45
    $region44: #{tpu_custom_call.1} parent=1 // pred_region
      %v162 = vld [vmem:[#allocation2] sm:$0xff]
      %v163 = vadd.f32 %v136, %v137
      %v164 = vadd.f32 %v162, %v163
      %165 = vst [vmem:[#allocation2] sm:$0xff] %v164
    $region45: #{tpu_custom_call.1} parent=1 // pred_fallthru
      _
    // Predicated region
    $region46: #{tpu_custom_call.1} parent=1 // pred_check
      %p166 = pneg %p113
    $region47: #{tpu_custom_call.1} parent=1 // pred_check_branch
      %168 = sbr.rel (%p166) target = $region49
    $region48: #{tpu_custom_call.1} parent=1 // pred_region
      %v169 = vld [vmem:[#allocation2] sm:$0xff]
      %v170 = vrot.slane %v169, 4
      %v171 = vadd.f32 %v169, %v170
      %v172 = vrot.slane %v171, 2
      %v173 = vadd.f32 %v171, %v172
      %v174 = vrot.slane %v173, 1
      %v175 = vadd.f32 %v173, %v174
      %176 = vst [vmem:[#allocation11] sm:$0x1] %v175
    $region49: #{tpu_custom_call.1} parent=1 // pred_fallthru
      _
    // Predicated region
    $region50: #{tpu_custom_call.1} parent=1 // pred_check
      _
    $region51: #{tpu_custom_call.1} parent=1 // pred_check_branch
      %178 = sbr.rel (0) target = $region53
    $region52: #{tpu_custom_call.1} parent=1 // pred_region
      %s180 = ssub.s32 16, 16
      %181 = vsyncadd [#allocation5], %s180
      %s183 = sshll.u32 [#allocation11], 4
      %s184 = int_to_ptr.vmem [resolvable:$true] %s183
      %186 = dma.vmem_to_hbm [thread:$0]  %s184, 16, %s4, [#allocation5]
    $region53: #{tpu_custom_call.1} parent=1 // pred_fallthru
      _
    // Predicated region
    $region54: #{tpu_custom_call.1} parent=1 // pred_check
      _
    $region55: #{tpu_custom_call.1} parent=1 // pred_check_branch
      %188 = sbr.rel (0) target = $region57
    $region56: #{tpu_custom_call.1} parent=1 // pred_region
      %189 = dma.done [#allocation5], 16
    $region57: #{tpu_custom_call.1} parent=1 // pred_fallthru
      _
    %190 = vsyncpa [#allocation4], 1
    %191 = vsyncpa [#allocation7], 1
    %192 = vsyncpa [#allocation10], 1
    %193 = vsyncpa [#allocation5], 1

</llo_original>
